<compile_context>
chip_gen: v6e
topology: v6e:2x2x1
jax: 0.10.0
libtpu: 0.0.40
codegen_flags: <defaults>
</compile_context>

<pallas_src>
import functools

import jax
import jax.numpy as jnp
from jax.experimental import pallas as pl
from jax.experimental.pallas import tpu as pltpu


# ----------------------------- tiling helpers ------------------------------

def _pick_tile(dim, desired, granule):
    """Largest tile <= desired that divides `dim` and is `granule`-aligned.

    Falls back to the full dimension (always legal: block == array dim).
    """
    if dim <= desired:
        return dim
    t = (desired // granule) * granule
    while t >= granule:
        if dim % t == 0:
            return t
        t -= granule
    return dim


_INV_SQRT2 = 0.7071067811865476
# Scoped-VMEM budget: v7x has 64 MiB physical (32 MiB scoped default); 48 MiB
# leaves headroom there and is far below v5e/v6e's 128 MiB.
_VMEM_LIMIT_BYTES = 48 * 1024 * 1024


# ----------------------------- Pallas kernels ------------------------------

def _patch_embed_kernel(x_ref, w_ref, b_ref, o_ref):
    # One batch: x_ref is (1, C_in, N) NCHW pixels.  The NCHW -> token-major
    # transpose is folded into the MXU contraction (contract C_in).
    # Note: K = C_in is a degenerate MXU depth; the op is tiny so we keep the
    # single near-empty MXU pass rather than adding layout churn.
    x = x_ref[0].astype(jnp.bfloat16)                        # (C_in, N)
    y = jax.lax.dot_general(x, w_ref[...],                   # contract C_in
                            (((0,), (0,)), ((), ())),
                            preferred_element_type=jnp.float32)  # (N, D)
    o_ref[...] = (y + b_ref[...]).astype(o_ref.dtype)


def _ln_matmul_kernel(x_ref, g_ref, bln_ref, w_ref, b_ref, o_ref, xln_ref, *, gelu):
    # Fused: LayerNorm(eps=1e-6) prologue -> bf16 MXU matmul -> bias (+ erf GELU).
    # LN + bf16 cast of the (tm, K) row tile is computed ONCE (at the first
    # output-column tile) into VMEM scratch and reused across all j tiles.
    @pl.when(pl.program_id(1) == 0)
    def _():
        x = x_ref[...].astype(jnp.float32)                   # (tm, K)
        mu = jnp.mean(x, axis=-1, keepdims=True)
        xc = x - mu
        var = jnp.mean(xc * xc, axis=-1, keepdims=True)
        y = (xc * jax.lax.rsqrt(var + 1e-6)) * g_ref[...] + bln_ref[...]
        xln_ref[...] = y.astype(jnp.bfloat16)

    acc = jnp.dot(xln_ref[...], w_ref[...],
                  preferred_element_type=jnp.float32) + b_ref[...]
    if gelu:  # exact (erf) GELU, as in nn.GELU()
        acc = 0.5 * acc * (1.0 + jax.lax.erf(acc * _INV_SQRT2))
    o_ref[...] = acc.astype(o_ref.dtype)


def _matmul_residual_kernel(x_ref, w_ref, b_ref, r_ref, o_ref, acc_ref):
    # Tiled matmul with K-loop + VMEM f32 accumulator; bias + residual fused
    # into the final-K writeback.  Residual stream is bf16 in HBM.
    @pl.when(pl.program_id(2) == 0)
    def _():
        acc_ref[...] = jnp.zeros_like(acc_ref)

    acc_ref[...] += jnp.dot(x_ref[...], w_ref[...],
                            preferred_element_type=jnp.float32)

    @pl.when(pl.program_id(2) == pl.num_programs(2) - 1)
    def _():
        o_ref[...] = (acc_ref[...] + b_ref[...]
                      + r_ref[...].astype(jnp.float32)).astype(o_ref.dtype)


def _attn_proj_residual_kernel(q_ref, k_ref, v_ref, w_ref, b_ref, r_ref,
                               o_ref, attn_ref, *, num_heads):
    # Fused attention + output projection + residual for one batch element.
    # q_ref/k_ref/v_ref: (N, D) bf16 column-slices of the packed (B*N, 3D) QKV.
    # The q columns already carry the head_dim**-0.5 scale (folded into the
    # QKV weights), so no per-score multiplies are needed here.
    # Per-head outputs land in the VMEM scratch `attn_ref`; the only HBM store
    # is the single lane-dense (N, D) projected + residual output.
    D = q_ref.shape[-1]
    hd = D // num_heads
    q = q_ref[...]
    k = k_ref[...]
    v = v_ref[...]
    # TODO(synk): for num_heads >= ~12 switch to lax.fori_loop(unroll=True)
    # with pl.ds ref slices to bound live ranges / vreg pressure.
    # TODO(synk): for long sequences (N >= ~1024) use flash-style KV tiling
    # with an online-softmax accumulator instead of a full (N, N) score tile
    # (required on v7x where 64 MiB VMEM is exceeded at N ~ 4096).
    for h in range(num_heads):                                # small static unroll
        sl = slice(h * hd, (h + 1) * hd)
        qh, kh, vh = q[:, sl], k[:, sl], v[:, sl]
        # Contract the head dim directly (no k.T materialization).
        s = jax.lax.dot_general(qh, kh, (((1,), (1,)), ((), ())),
                                preferred_element_type=jnp.float32)
        s = s - jnp.max(s, axis=-1, keepdims=True)
        p = jnp.exp(s)
        p = p * pl.reciprocal(jnp.sum(p, axis=-1, keepdims=True), approx=True)
        oh = jnp.dot(p.astype(vh.dtype), vh, preferred_element_type=jnp.float32)
        attn_ref[:, sl] = oh.astype(attn_ref.dtype)           # VMEM scratch write

    a = attn_ref[...]                                         # (N, D) bf16
    out = jnp.dot(a, w_ref[...], preferred_element_type=jnp.float32)
    out = out + b_ref[...] + r_ref[...].astype(jnp.float32)
    o_ref[...] = out.astype(o_ref.dtype)                      # one lane-dense store


def _final_norm_kernel(x_ref, g_ref, b_ref, o_ref):
    # Final LayerNorm on a (tn, D) token tile + token-major -> channel-major
    # (NCHW) transpose, written as a lane-dense (D, tn) slab.
    x = x_ref[...].astype(jnp.float32)                        # (tn, D)
    mu = jnp.mean(x, axis=-1, keepdims=True)
    xc = x - mu
    var = jnp.mean(xc * xc, axis=-1, keepdims=True)
    y = (xc * jax.lax.rsqrt(var + 1e-6)) * g_ref[...] + b_ref[...]
    o_ref[0] = y.T                                            # (D, tn)


# ----------------------------- Pallas wrappers ------------------------------

def patch_embed(x_bcn, w, b):
    """x_bcn: (B, C_in, N) f32, w: (C_in, D) bf16, b: (D,) -> (B*N, D) bf16."""
    B, C_in, N = x_bcn.shape
    D = w.shape[1]
    return pl.pallas_call(
        _patch_embed_kernel,
        grid=(B,),
        in_specs=[pl.BlockSpec((1, C_in, N), lambda i: (i, 0, 0)),
                  pl.BlockSpec((C_in, D), lambda i: (0, 0)),
                  pl.BlockSpec((1, D), lambda i: (0, 0))],
        out_specs=pl.BlockSpec((N, D), lambda i: (i, 0)),
        out_shape=jax.ShapeDtypeStruct((B * N, D), jnp.bfloat16),
        compiler_params=pltpu.CompilerParams(dimension_semantics=("parallel",)),
    )(x_bcn, w, b.reshape(1, D))


def ln_matmul(x, g, b_ln, w, bias, *, gelu=False, tm=256, tn=512):
    """Fused LayerNorm(x) @ w + bias (+ GELU). x: (M,K) bf16, w: (K,Nout) bf16.

    tm kept <= 256 by default: the row tile is full-K and double-buffered, so
    this stays inside v7x's 64 MiB VMEM even at ViT-L-class K.
    """
    M, K = x.shape
    Nout = w.shape[1]
    tm = _pick_tile(M, tm, 16)       # bf16 packs 2 rows/sublane -> 16 granule
    tn = _pick_tile(Nout, tn, 128)
    kern = functools.partial(_ln_matmul_kernel, gelu=gelu)
    return pl.pallas_call(
        kern,
        grid=(M // tm, Nout // tn),
        in_specs=[pl.BlockSpec((tm, K), lambda i, j: (i, 0)),   # j-invariant: 1 DMA per row tile
                  pl.BlockSpec((1, K), lambda i, j: (0, 0)),
                  pl.BlockSpec((1, K), lambda i, j: (0, 0)),
                  pl.BlockSpec((K, tn), lambda i, j: (0, j)),
                  pl.BlockSpec((1, tn), lambda i, j: (0, j))],
        out_specs=pl.BlockSpec((tm, tn), lambda i, j: (i, j)),
        out_shape=jax.ShapeDtypeStruct((M, Nout), jnp.bfloat16),
        scratch_shapes=[pltpu.VMEM((tm, K), jnp.bfloat16)],     # LN'd row tile, reused over j
        compiler_params=pltpu.CompilerParams(
            dimension_semantics=("parallel", "arbitrary"),
            vmem_limit_bytes=_VMEM_LIMIT_BYTES),
    )(x, g.reshape(1, K), b_ln.reshape(1, K), w, bias.reshape(1, Nout))


def matmul_residual(x, w, bias, res, *, tm=512, tn=512, tk=512):
    """x @ w + bias + res. x: (M,K) bf16, w: (K,Nout) bf16, res: (M,Nout) bf16."""
    M, K = x.shape
    Nout = w.shape[1]
    tm = _pick_tile(M, tm, 16)
    tn = _pick_tile(Nout, tn, 128)
    tk = _pick_tile(K, tk, 128)
    return pl.pallas_call(
        _matmul_residual_kernel,
        grid=(M // tm, Nout // tn, K // tk),
        in_specs=[pl.BlockSpec((tm, tk), lambda i, j, k: (i, k)),
                  pl.BlockSpec((tk, tn), lambda i, j, k: (k, j)),
                  pl.BlockSpec((1, tn), lambda i, j, k: (0, j)),
                  pl.BlockSpec((tm, tn), lambda i, j, k: (i, j))],
        out_specs=pl.BlockSpec((tm, tn), lambda i, j, k: (i, j)),
        out_shape=jax.ShapeDtypeStruct((M, Nout), jnp.bfloat16),
        scratch_shapes=[pltpu.VMEM((tm, tn), jnp.float32)],
        compiler_params=pltpu.CompilerParams(
            dimension_semantics=("parallel", "parallel", "arbitrary"),
            vmem_limit_bytes=_VMEM_LIMIT_BYTES),
    )(x, w, bias.reshape(1, Nout), res)


def attention_proj_residual(qkv, proj_w, proj_b, res, B, N, D, *, num_heads):
    """Fused multi-head attention + proj + residual.

    qkv: (B*N, 3D) bf16 packed [q | k | v] (q pre-scaled by head_dim**-0.5),
    proj_w: (D, D) bf16, res: (B*N, D) bf16  ->  (B*N, D) bf16.
    The q/k/v split is expressed purely via BlockSpec index_maps; the head
    split is static in-kernel slicing (no XLA reshape/transpose).
    """
    # TODO(synk): when B == 1, add a second parallel grid axis (q-tiles or
    # head groups) so v7x's two TensorCores both get work.
    kern = functools.partial(_attn_proj_residual_kernel, num_heads=num_heads)
    return pl.pallas_call(
        kern,
        grid=(B,),
        in_specs=[pl.BlockSpec((N, D), lambda b: (b, 0)),   # q columns
                  pl.BlockSpec((N, D), lambda b: (b, 1)),   # k columns
                  pl.BlockSpec((N, D), lambda b: (b, 2)),   # v columns
                  pl.BlockSpec((D, D), lambda b: (0, 0)),   # proj_w (resident)
                  pl.BlockSpec((1, D), lambda b: (0, 0)),   # proj_b
                  pl.BlockSpec((N, D), lambda b: (b, 0))],  # residual
        out_specs=pl.BlockSpec((N, D), lambda b: (b, 0)),
        out_shape=jax.ShapeDtypeStruct((B * N, D), jnp.bfloat16),
        scratch_shapes=[pltpu.VMEM((N, D), jnp.bfloat16)],
        compiler_params=pltpu.CompilerParams(
            dimension_semantics=("parallel",),
            vmem_limit_bytes=_VMEM_LIMIT_BYTES),
    )(qkv, qkv, qkv, proj_w, proj_b.reshape(1, D), res)


def final_norm_nchw(h, g, b, B, N, D, *, tn=512):
    """LayerNorm(h) then permute to (B, D, N), tiled over N."""
    tn = _pick_tile(N, tn, 128)
    n_tiles = N // tn
    return pl.pallas_call(
        _final_norm_kernel,
        grid=(B, n_tiles),
        in_specs=[pl.BlockSpec((tn, D), lambda i, j: (i * n_tiles + j, 0)),
                  pl.BlockSpec((1, D), lambda i, j: (0, 0)),
                  pl.BlockSpec((1, D), lambda i, j: (0, 0))],
        out_specs=pl.BlockSpec((1, D, tn), lambda i, j: (i, 0, j)),
        out_shape=jax.ShapeDtypeStruct((B, D, N), jnp.float32),
        compiler_params=pltpu.CompilerParams(
            dimension_semantics=("parallel", "parallel")),
    )(h, g.reshape(1, D), b.reshape(1, D))


# ----------------------------- parameter init -------------------------------

def init_params(key, *, in_c, embed_dim, depth, num_heads, mlp_ratio):
    hidden = int(embed_dim * mlp_ratio)
    head_dim = embed_dim // num_heads
    scale = head_dim ** -0.5

    def trunc_normal_f32(k, shape, std=0.01):
        return std * jax.random.truncated_normal(k, -2.0, 2.0, shape, jnp.float32)

    keys = jax.random.split(key, 1 + 4 * depth)
    params = {}
    # PatchEmbed: Conv2d(in_c, embed_dim, 1, 1) -> kaiming_normal fan_out, zero bias.
    fan_out = embed_dim  # out_channels * 1 * 1
    params["conv_w"] = (jnp.sqrt(2.0 / fan_out)
                        * jax.random.normal(keys[0], (in_c, embed_dim), jnp.float32)
                        ).astype(jnp.bfloat16)
    params["conv_b"] = jnp.zeros((embed_dim,), jnp.float32)

    blocks = []
    for d in range(depth):
        k0, k1, k2, k3 = keys[1 + 4 * d: 1 + 4 * (d + 1)]
        # Fold the attention scale into the q-columns of the QKV weight/bias
        # (mathematically identical to scaling the scores).  When loading real
        # PyTorch weights, apply the same fold: qkv_w[:, :D] *= scale, qkv_b[:D] *= scale.
        qkv_w = trunc_normal_f32(k0, (embed_dim, 3 * embed_dim))
        qkv_w = qkv_w.at[:, :embed_dim].multiply(scale)
        qkv_b = jnp.zeros((3 * embed_dim,), jnp.float32)        # qkv_bias=True, zero init
        qkv_b = qkv_b.at[:embed_dim].multiply(scale)
        blocks.append({
            "ln1_g": jnp.ones((embed_dim,), jnp.float32),
            "ln1_b": jnp.zeros((embed_dim,), jnp.float32),
            "qkv_w": qkv_w.astype(jnp.bfloat16),
            "qkv_b": qkv_b,
            "proj_w": trunc_normal_f32(k1, (embed_dim, embed_dim)).astype(jnp.bfloat16),
            "proj_b": jnp.zeros((embed_dim,), jnp.float32),
            "ln2_g": jnp.ones((embed_dim,), jnp.float32),
            "ln2_b": jnp.zeros((embed_dim,), jnp.float32),
            "fc1_w": trunc_normal_f32(k2, (embed_dim, hidden)).astype(jnp.bfloat16),
            "fc1_b": jnp.zeros((hidden,), jnp.float32),
            "fc2_w": trunc_normal_f32(k3, (hidden, embed_dim)).astype(jnp.bfloat16),
            "fc2_b": jnp.zeros((embed_dim,), jnp.float32),
        })
    params["blocks"] = blocks
    params["norm_g"] = jnp.ones((embed_dim,), jnp.float32)
    params["norm_b"] = jnp.zeros((embed_dim,), jnp.float32)
    params["num_heads"] = num_heads
    return params


# ------------------------------- forward pass -------------------------------

def vit_forward(x, params):
    """x: NCHW (B, in_c, H, W)  ->  NCHW (B, embed_dim, H, W)."""
    B, C_in, H, W = x.shape
    N = H * W
    D = params["conv_w"].shape[1]
    nh = params["num_heads"]

    # PatchEmbed: 1x1 conv == per-pixel linear; token-major bf16 output (B*N, D).
    h = patch_embed(x.reshape(B, C_in, N), params["conv_w"], params["conv_b"])

    for blk in params["blocks"]:
        # --- Attention branch (dropout / drop_path are identity at inference) ---
        qkv = ln_matmul(h, blk["ln1_g"], blk["ln1_b"],
                        blk["qkv_w"], blk["qkv_b"])                  # (B*N, 3D) bf16
        h = attention_proj_residual(qkv, blk["proj_w"], blk["proj_b"],
                                    h, B, N, D, num_heads=nh)        # (B*N, D) bf16

        # --- MLP branch ---
        y = ln_matmul(h, blk["ln2_g"], blk["ln2_b"],
                      blk["fc1_w"], blk["fc1_b"], gelu=True)         # (B*N, hidden) bf16
        h = matmul_residual(y, blk["fc2_w"], blk["fc2_b"], h)        # (B*N, D) bf16

    out = final_norm_nchw(h, params["norm_g"], params["norm_b"], B, N, D)
    return out.reshape(B, D, H, W)


# ----------------------------------- main ------------------------------------

if __name__ == "__main__":
    # Small config consistent with the module: image 16x16, 1x1 "patches",
    # 4 input channels, embed_dim 128 (128-lane friendly), 2 blocks, 4 heads.
    B, in_c, H, W = 2, 4, 16, 16
    embed_dim, depth, num_heads, mlp_ratio = 128, 2, 4, 4.0

    key = jax.random.PRNGKey(0)
    kx, kp = jax.random.split(key)
    x = jax.random.normal(kx, (B, in_c, H, W), jnp.float32)   # NCHW, like PyTorch
    params = init_params(kp, in_c=in_c, embed_dim=embed_dim, depth=depth,
                         num_heads=num_heads, mlp_ratio=mlp_ratio)

    out = vit_forward(x, params)
    out = jax.block_until_ready(out)
    assert out.shape == (B, embed_dim, H, W), out.shape
    assert bool(jnp.all(jnp.isfinite(out)))
    print("KERNEL_OK")
</pallas_src>

<mosaic_0001>
module attributes {stable_mosaic.version = 11 : i64} {
  func.func @_patch_embed_kernel(%arg0: i32, %arg1: memref<1x4x256xf32, #tpu.memory_space<vmem>>, %arg2: memref<4x128xbf16, #tpu.memory_space<vmem>>, %arg3: memref<1x128xf32, #tpu.memory_space<vmem>>, %arg4: memref<256x128xbf16, #tpu.memory_space<vmem>>) attributes {dimension_semantics = [#tpu.dimension_semantics<parallel>], iteration_bounds = array<i64: 2>, scalar_prefetch = 0 : i64, scratch_operands = 0 : i64, tpu.core_type = #tpu.core_type<tc>, window_params = [{transform_indices = @transform_0, window_bounds = array<i64: 1, 4, 256>}, {pipeline_mode = #tpu.pipeline_mode<synchronous>, transform_indices = @transform_1, window_bounds = array<i64: 4, 128>}, {pipeline_mode = #tpu.pipeline_mode<synchronous>, transform_indices = @transform_2, window_bounds = array<i64: 1, 128>}, {transform_indices = @transform_3, window_bounds = array<i64: 256, 128>}]} {
    %c0 = arith.constant 0 : index
    %c0_0 = arith.constant 0 : index
    %c0_1 = arith.constant 0 : index
    %0 = vector.load %arg1[%c0, %c0_0, %c0_1] : memref<1x4x256xf32, #tpu.memory_space<vmem>>, vector<1x4x256xf32>
    %1 = vector.shape_cast %0 : vector<1x4x256xf32> to vector<4x256xf32>
    %2 = arith.truncf %1 : vector<4x256xf32> to vector<4x256xbf16>
    %c0_2 = arith.constant 0 : index
    %c0_3 = arith.constant 0 : index
    %3 = vector.load %arg2[%c0_2, %c0_3] : memref<4x128xbf16, #tpu.memory_space<vmem>>, vector<4x128xbf16>
    %cst = arith.constant dense<0.000000e+00> : vector<256x128xf32>
    %4 = tpu.matmul %2, %3, %cst {dimension_numbers = #tpu.dot_dimension_numbers<[0], [0], [1], [1], [0, 1, 1, 1], [], []>} : vector<4x256xbf16>, vector<4x128xbf16>, vector<256x128xf32> -> vector<256x128xf32>
    %c0_4 = arith.constant 0 : index
    %c0_5 = arith.constant 0 : index
    %5 = vector.load %arg3[%c0_4, %c0_5] : memref<1x128xf32, #tpu.memory_space<vmem>>, vector<1x128xf32>
    %6 = vector.broadcast %5 : vector<1x128xf32> to vector<256x128xf32>
    %7 = arith.addf %4, %6 : vector<256x128xf32>
    %8 = arith.truncf %7 : vector<256x128xf32> to vector<256x128xbf16>
    %c0_6 = arith.constant 0 : index
    %c0_7 = arith.constant 0 : index
    %9 = vector.load %arg4[%c0_6, %c0_7] : memref<256x128xbf16, #tpu.memory_space<vmem>>, vector<256x128xbf16>
    tpu.vector_store %arg4[%c0_6, %c0_7], %8 {strides = array<i32>} : memref<256x128xbf16, #tpu.memory_space<vmem>>, vector<256x128xbf16>,
    return
  }
  func.func @transform_0(%arg0: i32) -> (i32, i32, i32) {
    %c0_i32 = arith.constant 0 : i32
    %c0_i32_0 = arith.constant 0 : i32
    %c0_i32_1 = arith.constant 0 : i32
    return %arg0, %c0_i32, %c0_i32_0 : i32, i32, i32
  }
  func.func @transform_1(%arg0: i32) -> (i32, i32) {
    %c0_i32 = arith.constant 0 : i32
    %c0_i32_0 = arith.constant 0 : i32
    %c0_i32_1 = arith.constant 0 : i32
    return %c0_i32, %c0_i32_0 : i32, i32
  }
  func.func @transform_2(%arg0: i32) -> (i32, i32) {
    %c0_i32 = arith.constant 0 : i32
    %c0_i32_0 = arith.constant 0 : i32
    %c0_i32_1 = arith.constant 0 : i32
    return %c0_i32, %c0_i32_0 : i32, i32
  }
  func.func @transform_3(%arg0: i32) -> (i32, i32) {
    %c0_i32 = arith.constant 0 : i32
    %c0_i32_0 = arith.constant 0 : i32
    return %arg0, %c0_i32 : i32, i32
  }
}

</mosaic_0001>

<llo_original>
// kernel: tpu_custom_call.1
$region0: #{tpu_custom_call.1}
  #allocation0 [shape = 'u32[]', space=smem, size = 0x4, offset = 0x4, fixed_abs, tag = 'smem constant byte address 0x4 - core index']
  #allocation1 [shape = 'u32[144,128]{1,0:T(1,128)}', space=vmem, size = 0x12000, scoped, tag = 'internal scratch']
  %s0 = inlined_call_operand.hbm [shape: f32[2,4,256], index: 0, kind: input, shape index: {}]
  %s1 = inlined_call_operand.hbm [shape: bf16[4,128], index: 1, kind: input, shape index: {}]
  %s2 = inlined_call_operand.vmem [shape: f32[1,128], index: 2, kind: input, shape index: {}]
  %s3 = inlined_call_operand.hbm [shape: bf16[512,128], index: 3, kind: output, shape index: {}]
  %s4 = sld [smem:[#allocation0]]
  $region53: #{tpu_custom_call.1} parent=0
    _
  %s6 = ssub.s32 1, %s4
  %s7 = scalar_select 0, %s6, %s4
  $region1: #{tpu_custom_call.1} parent=0
    #allocation2 [shape = 'u8[8192]{0}', space=vmem, size = 0x2000, scoped, tag = 'input window, operand 0']
    #allocation3 [shape = 's32[2]{0}', space=sflag, size = 0x8, scoped, tag = 'scoped memory for tpu_custom_call.1']
    #allocation4 [shape = 's32[2]{0}', space=sflag, size = 0x8, scoped, tag = 'scoped memory for tpu_custom_call.1']
    #allocation5 [shape = 'u8[1024]{0}', space=vmem, size = 0x400, scoped, tag = 'input window, operand 1, single buffered']
    #allocation6 [shape = 's32[1]{0}', space=sflag, size = 0x4, scoped, tag = 'scoped memory for tpu_custom_call.1']
    #allocation7 [shape = 'u8[131072]{0}', space=vmem, size = 0x20000, scoped, tag = 'output window, operand 0']
    %8 = vsyncpa [#allocation3], 0
    %s9 = scalar_lea.sflag [#allocation3], 1
    %10 = vsyncpa %s9, 0
    %11 = vsyncpa [#allocation6], 0
    %12 = vsyncpa [#allocation4], 0
    %s13 = scalar_lea.sflag [#allocation4], 1
    %14 = vsyncpa %s13, 0
    loop: start=0, step=1, limit=4
    $region2: #{tpu_custom_call.1} parent=1 // loop_pre_header
      _
    $region3: #{tpu_custom_call.1} parent=1 // loop_header
      %s16 = sphi 0, %s20
      %p17 = scmp.ge.s32.totalorder %s16, 4
      %s26 = sphi 0, %s28
      %s29 = sphi 0, %s26
      %s30 = sphi 0, %s29
      %s46 = sphi 0, %s30
      %s50 = sphi 0, %s50
      %s52 = sphi 0, %s50
      %s53 = sphi 0, %s52
      %s67 = sphi 0, %s53
      %s71 = sphi 0, %s71
      %s73 = sphi 0, %s71
      %s74 = sphi 0, %s73
      %s88 = sphi 0, %s74
      %s94 = sphi 0, %s96
      %s97 = sphi 0, %s94
      %s98 = sphi 0, %s97
      %s114 = sphi 0, %s98
    $region4: #{tpu_custom_call.1} parent=1 // loop_header_branch
      %19 = sbr.rel (%p17) target = $region8
    $region5: #{tpu_custom_call.1} parent=1 // loop_body
      %s21 = ssub.s32 %s16, 1
      %s22 = ssub.s32 %s16, 2
      %s23 = sadd.s32 %s16, 1
      %s24 = ssub.s32 %s16, %s23
      %p25 = scmp.eq.s32.totalorder %s24, 0
      %s27 = sadd.s32 %s26, 1
      %s28 = scalar_select %p25, %s26, %s27
      %p31 = pneg %p25
      %p32 = scmp.eq.s32.totalorder %s16, 1
      %p33 = por %p31, %p32
      %p34 = scmp.ne.s32.totalorder %s26, %s29
      %p35 = scmp.eq.s32.totalorder %s16, 0
      %p36 = por %p34, %p35
      %p37 = scmp.ne.s32.totalorder %s26, %s29
      %p38 = scmp.eq.s32.totalorder %s21, 1
      %p39 = por %p37, %p38
      %p40 = scmp.ne.s32.totalorder %s29, %s30
      %p41 = scmp.eq.s32.totalorder %s21, 0
      %p42 = por %p40, %p41
      %p43 = scmp.ne.s32.totalorder %s29, %s30
      %p44 = scmp.eq.s32.totalorder %s22, 1
      %p45 = por %p43, %p44
      %p47 = scmp.ne.s32.totalorder %s30, %s46
      %p48 = scmp.eq.s32.totalorder %s22, 0
      %p49 = por %p47, %p48
      %s51 = sadd.s32 %s50, 1
      %p54 = scmp.eq.s32.totalorder %s16, 1
      %p55 = scmp.ne.s32.totalorder %s50, %s52
      %p56 = scmp.eq.s32.totalorder %s16, 0
      %p57 = por %p55, %p56
      %p58 = scmp.ne.s32.totalorder %s50, %s52
      %p59 = scmp.eq.s32.totalorder %s21, 1
      %p60 = por %p58, %p59
      %p61 = scmp.ne.s32.totalorder %s52, %s53
      %p62 = scmp.eq.s32.totalorder %s21, 0
      %p63 = por %p61, %p62
      %p64 = scmp.ne.s32.totalorder %s52, %s53
      %p65 = scmp.eq.s32.totalorder %s22, 1
      %p66 = por %p64, %p65
      %p68 = scmp.ne.s32.totalorder %s53, %s67
      %p69 = scmp.eq.s32.totalorder %s22, 0
      %p70 = por %p68, %p69
      %s72 = sadd.s32 %s71, 1
      %p75 = scmp.eq.s32.totalorder %s16, 1
      %p76 = scmp.ne.s32.totalorder %s71, %s73
      %p77 = scmp.eq.s32.totalorder %s16, 0
      %p78 = por %p76, %p77
      %p79 = scmp.ne.s32.totalorder %s71, %s73
      %p80 = scmp.eq.s32.totalorder %s21, 1
      %p81 = por %p79, %p80
      %p82 = scmp.ne.s32.totalorder %s73, %s74
      %p83 = scmp.eq.s32.totalorder %s21, 0
      %p84 = por %p82, %p83
      %p85 = scmp.ne.s32.totalorder %s73, %s74
      %p86 = scmp.eq.s32.totalorder %s22, 1
      %p87 = por %p85, %p86
      %p89 = scmp.ne.s32.totalorder %s74, %s88
      %p90 = scmp.eq.s32.totalorder %s22, 0
      %p91 = por %p89, %p90
      %s92 = ssub.s32 %s16, %s23
      %p93 = scmp.eq.s32.totalorder %s92, 0
      %s95 = sadd.s32 %s94, 1
      %s96 = scalar_select %p93, %s94, %s95
      %p99 = pneg %p93
      %p100 = scmp.eq.s32.totalorder %s16, 1
      %p101 = por %p99, %p100
      %p102 = scmp.ne.s32.totalorder %s94, %s97
      %p103 = scmp.eq.s32.totalorder %s16, 0
      %p104 = por %p102, %p103
      %p105 = scmp.ne.s32.totalorder %s94, %s97
      %p106 = scmp.eq.s32.totalorder %s21, 1
      %p107 = por %p105, %p106
      %p108 = scmp.ne.s32.totalorder %s97, %s98
      %p109 = scmp.eq.s32.totalorder %s21, 0
      %p110 = por %p108, %p109
      %p111 = scmp.ne.s32.totalorder %s97, %s98
      %p112 = scmp.eq.s32.totalorder %s22, 1
      %p113 = por %p111, %p112
      %p115 = scmp.ne.s32.totalorder %s98, %s114
      %p116 = scmp.eq.s32.totalorder %s22, 0
      %p117 = por %p115, %p116
      %p118 = scmp.le.s32.totalorder 1, %s16
      %p119 = scmp.lt.s32.totalorder %s16, 3
      %p120 = pnand %p118, %p119
      %p121 = pneg %p120
      // Predicated region
      $region9: #{tpu_custom_call.1} parent=5 // pred_check
        _
      $region10: #{tpu_custom_call.1} parent=5 // pred_check_branch
        %123 = sbr.rel (%p120) target = $region12
      $region11: #{tpu_custom_call.1} parent=5 // pred_region
        %s124 = ssub.s32 %s16, 1
        // Predicated region
        $region13: #{tpu_custom_call.1} parent=11 // pred_check
          %p125 = pneg %p63
        $region14: #{tpu_custom_call.1} parent=11 // pred_check_branch
          %127 = sbr.rel (%p125) target = $region16
        $region15: #{tpu_custom_call.1} parent=11 // pred_region
          %s129 = ssub.s32 32, 32
          %130 = vsyncadd [#allocation6], %s129
          %s132 = sshll.u32 [#allocation5], 4
          %s133 = int_to_ptr.vmem [resolvable:$true] %s132
          %135 = dma.hbm_to_vmem [thread:$0]  %s1, 32, %s133, [#allocation6]
        $region16: #{tpu_custom_call.1} parent=11 // pred_fallthru
          _
        // Predicated region
        $region17: #{tpu_custom_call.1} parent=11 // pred_check
          %p136 = pneg %p84
        $region18: #{tpu_custom_call.1} parent=11 // pred_check_branch
          %138 = sbr.rel (%p136) target = $region20
        $region19: #{tpu_custom_call.1} parent=11 // pred_region
          _
        $region20: #{tpu_custom_call.1} parent=11 // pred_fallthru
          _
      $region12: #{tpu_custom_call.1} parent=5 // pred_fallthru
        _
      %p139 = scmp.lt.s32.totalorder %s16, 2
      // Predicated region
      $region21: #{tpu_custom_call.1} parent=5 // pred_check
        %p140 = pneg %p139
      $region22: #{tpu_custom_call.1} parent=5 // pred_check_branch
        %142 = sbr.rel (%p140) target = $region24
      $region23: #{tpu_custom_call.1} parent=5 // pred_region
        // Predicated region
        $region25: #{tpu_custom_call.1} parent=23 // pred_check
          %p143 = pneg %p36
        $region26: #{tpu_custom_call.1} parent=23 // pred_check_branch
          %145 = sbr.rel (%p143) target = $region28
        $region27: #{tpu_custom_call.1} parent=23 // pred_region
          %s146 = sand.u32 %s26, 1
          %s147 = scalar_lea.sflag [#allocation3], %s146
          %s148 = sand.u32 %s26, 1
          %s149 = smul.addr %s148, 8
          %s150 = scalar_lea.vmem [#allocation2], %s149
          %s152 = ssub.s32 128, 128
          %153 = vsyncadd %s147, %s152
          %s154 = smul.addr %s16, 2
          %s155 = smul.addr %s154, 64
          %s156 = scalar_lea.hbm %s0, %s155
          %s158 = sshll.u32 %s150, 4
          %s159 = int_to_ptr.vmem [resolvable:$true] %s158
          %161 = dma.hbm_to_vmem [thread:$0]  %s156, 128, %s159, %s147
        $region28: #{tpu_custom_call.1} parent=23 // pred_fallthru
          _
      $region24: #{tpu_custom_call.1} parent=5 // pred_fallthru
        _
      %p162 = scmp.le.s32.totalorder 1, %s16
      %p163 = scmp.lt.s32.totalorder %s16, 3
      %p164 = pnand %p162, %p163
      %p165 = pneg %p164
      // Predicated region
      $region29: #{tpu_custom_call.1} parent=5 // pred_check
        _
      $region30: #{tpu_custom_call.1} parent=5 // pred_check_branch
        %167 = sbr.rel (%p164) target = $region32
      $region31: #{tpu_custom_call.1} parent=5 // pred_region
        %s168 = ssub.s32 %s16, 1
        %s169 = sand.u32 %s29, 1
        %s170 = scalar_lea.sflag [#allocation3], %s169
        %s171 = sand.u32 %s29, 1
        %s172 = smul.addr %s171, 8
        %s173 = scalar_lea.vmem [#allocation2], %s172
        // Predicated region
        $region33: #{tpu_custom_call.1} parent=31 // pred_check
          %p174 = pneg %p42
        $region34: #{tpu_custom_call.1} parent=31 // pred_check_branch
          %176 = sbr.rel (%p174) target = $region36
        $region35: #{tpu_custom_call.1} parent=31 // pred_region
          %177 = dma.done %s170, 128
        $region36: #{tpu_custom_call.1} parent=31 // pred_fallthru
          _
        // Predicated region
        $region37: #{tpu_custom_call.1} parent=31 // pred_check
          %p178 = pneg %p63
        $region38: #{tpu_custom_call.1} parent=31 // pred_check_branch
          %180 = sbr.rel (%p178) target = $region40
        $region39: #{tpu_custom_call.1} parent=31 // pred_region
          %181 = dma.done [#allocation6], 32
        $region40: #{tpu_custom_call.1} parent=31 // pred_fallthru
          _
        %s182 = sand.u32 %s29, 1
        %s183 = scalar_lea.sflag [#allocation3], %s182
        %s184 = sand.u32 %s29, 1
        %s185 = smul.addr %s184, 8
        %s186 = scalar_lea.vmem [#allocation2], %s185
        %p187 = pneg %p42
        %p188 = pneg %p39
        %p189 = pneg %p63
        %p190 = pneg %p60
        %p191 = pneg %p84
        %p192 = pneg %p81
        %p193 = pneg %p110
        %p194 = pneg %p107
        %s195 = sand.u32 %s97, 1
        %s196 = scalar_lea.sflag [#allocation4], %s195
        %s197 = sand.u32 %s97, 1
        %s198 = smul.addr %s197, 128
        %s199 = scalar_lea.vmem [#allocation7], %s198
        %s200 = smul.u32 32, %s21
        %v202 = vld [vmem:[%s173] sm:$0xff]
        %v204 = vcombine.high %v202, %v202
        %v206 = vpack.c.bf16 %v202, %v202
        %v207 = vpack.c.bf16 %v204, %v204
        %v208 = vld [vmem:[#allocation5] sm:$0x3]
        %v209 = vld [vmem:[%s2] sm:$0x1]
        %v211 = vlaneseq
        %v212 = vshrl.u32 %v211, 7
        %v213 = vsub.s32 0, %v212
        %v214 = vrot.slane %v209, %v213
        %216 = vxpose.xlu0.c.b16.start [1/8] %v206, 128
        %217 = vxpose.xlu0.c.b16.cont [2/8] 0, 128
        %218 = vxpose.xlu0.c.b16.cont [3/8] 0, 128
        %219 = vxpose.xlu0.c.b16.cont [4/8] 0, 128
        %220 = vxpose.xlu0.c.b16.cont [5/8] 0, 128
        %221 = vxpose.xlu0.c.b16.cont [6/8] 0, 128
        %222 = vxpose.xlu0.c.b16.cont [7/8] 0, 128
        %223 = vxpose.xlu0.c.b16.end [8/8] 0, 128
        %v224 = vpop.trf.xlu0
        %v225 = vpop.trf.xlu0
        %v226 = vpop.trf.xlu0
        %v227 = vpop.trf.xlu0
        %v228 = vpop.trf.xlu0
        %v229 = vpop.trf.xlu0
        %v230 = vpop.trf.xlu0
        %v231 = vpop.trf.xlu0
        %232 = vxpose.xlu0.c.b16.start [1/8] %v207, 128
        %233 = vxpose.xlu0.c.b16.cont [2/8] 0, 128
        %234 = vxpose.xlu0.c.b16.cont [3/8] 0, 128
        %235 = vxpose.xlu0.c.b16.cont [4/8] 0, 128
        %236 = vxpose.xlu0.c.b16.cont [5/8] 0, 128
        %237 = vxpose.xlu0.c.b16.cont [6/8] 0, 128
        %238 = vxpose.xlu0.c.b16.cont [7/8] 0, 128
        %239 = vxpose.xlu0.c.b16.end [8/8] 0, 128
        %v240 = vpop.trf.xlu0
        %v241 = vpop.trf.xlu0
        %v242 = vpop.trf.xlu0
        %v243 = vpop.trf.xlu0
        %v244 = vpop.trf.xlu0
        %v245 = vpop.trf.xlu0
        %v246 = vpop.trf.xlu0
        %v247 = vpop.trf.xlu0
        %vm248 = vcmask 31744
        %v250 = vsel %vm248, %v224, 0
        %v253 = vsel %vm248, %v225, 0
        %v256 = vsel %vm248, %v226, 0
        %v259 = vsel %vm248, %v227, 0
        %v262 = vsel %vm248, %v228, 0
        %v265 = vsel %vm248, %v229, 0
        %v268 = vsel %vm248, %v230, 0
        %v271 = vsel %vm248, %v231, 0
        %v274 = vsel %vm248, %v240, 0
        %v277 = vsel %vm248, %v241, 0
        %v280 = vsel %vm248, %v242, 0
        %v283 = vsel %vm248, %v243, 0
        %v286 = vsel %vm248, %v244, 0
        %v289 = vsel %vm248, %v245, 0
        %v292 = vsel %vm248, %v246, 0
        %v295 = vsel %vm248, %v247, 0
        %vm297 = vcmask 1041408
        %v299 = vsel %vm297, %v208, 0
        %301 = vmatprep.subr.bf16.mxu0 0
        %302 = vmatpush1.bf16.msra.mxu0 0
        %303 = vmatprep.subr.bf16.mxu0 0
        %304 = vmatpush1.bf16.msra.mxu0 0
        %305 = vmatprep.subr.bf16.mxu0 0
        %306 = vmatpush1.bf16.msra.mxu0 0
        %307 = vmatprep.subr.bf16.mxu0 0
        %308 = vmatpush1.bf16.msra.mxu0 0
        %309 = vmatprep.subr.bf16.mxu0 0
        %310 = vmatpush1.bf16.msra.mxu0 0
        %311 = vmatprep.subr.bf16.mxu0 0
        %312 = vmatpush1.bf16.msra.mxu0 0
        %313 = vmatprep.subr.bf16.mxu0 0
        %314 = vmatpush1.bf16.msra.mxu0 0
        %315 = vmatprep.subr.bf16.mxu0 0
        %316 = vmatpush1.bf16.msra.mxu0 %v299
        %317 = vmatprep.subr.bf16.mxu0 0
        %318 = vmatpush2.bf16.msra.mxu0 0
        %319 = vmatprep.subr.bf16.mxu0 0
        %320 = vmatpush2.bf16.msra.mxu0 0
        %321 = vmatprep.subr.bf16.mxu0 0
        %322 = vmatpush2.bf16.msra.mxu0 0
        %323 = vmatprep.subr.bf16.mxu0 0
        %324 = vmatpush2.bf16.msra.mxu0 0
        %325 = vmatprep.subr.bf16.mxu0 0
        %326 = vmatpush2.bf16.msra.mxu0 0
        %327 = vmatprep.subr.bf16.mxu0 0
        %328 = vmatpush2.bf16.msra.mxu0 0
        %329 = vmatprep.subr.bf16.mxu0 0
        %330 = vmatpush2.bf16.msra.mxu0 0
        %331 = vmatprep.subr.bf16.mxu0 0
        %332 = vmatpush2.bf16.msra.mxu0 0
        %333 = vmatprep.mubr.bf16.mxu0 0
        %334 = vmatmul.mubr.bf16.gmra.mxu0 %v250
        %v335 = vpop.f32.mrf.mxu0
        %v336 = vadd.f32 %v214, %v335
        %v337 = vpop.f32.mrf.mxu0
        %v338 = vpop.f32.mrf.mxu0
        %v339 = vadd.f32 %v214, %v338
        %v340 = vpop.f32.mrf.mxu0
        %341 = vmatprep.mubr.bf16.mxu0 0
        %342 = vmatmul.mubr.bf16.gmra.mxu0 %v253
        %v343 = vpop.f32.mrf.mxu0
        %v344 = vadd.f32 %v214, %v343
        %v345 = vpop.f32.mrf.mxu0
        %v346 = vpop.f32.mrf.mxu0
        %v347 = vadd.f32 %v214, %v346
        %v348 = vpop.f32.mrf.mxu0
        %349 = vmatprep.mubr.bf16.mxu0 0
        %350 = vmatmul.mubr.bf16.gmra.mxu0 %v256
        %v351 = vpop.f32.mrf.mxu0
        %v352 = vadd.f32 %v214, %v351
        %v353 = vpop.f32.mrf.mxu0
        %v354 = vpop.f32.mrf.mxu0
        %v355 = vadd.f32 %v214, %v354
        %v356 = vpop.f32.mrf.mxu0
        %357 = vmatprep.mubr.bf16.mxu0 0
        %358 = vmatmul.mubr.bf16.gmra.mxu0 %v259
        %v359 = vpop.f32.mrf.mxu0
        %v360 = vadd.f32 %v214, %v359
        %v361 = vpop.f32.mrf.mxu0
        %v362 = vpop.f32.mrf.mxu0
        %v363 = vadd.f32 %v214, %v362
        %v364 = vpop.f32.mrf.mxu0
        %365 = vmatprep.mubr.bf16.mxu0 0
        %366 = vmatmul.mubr.bf16.gmra.mxu0 %v262
        %v367 = vpop.f32.mrf.mxu0
        %v368 = vadd.f32 %v214, %v367
        %v369 = vpop.f32.mrf.mxu0
        %v370 = vpop.f32.mrf.mxu0
        %v371 = vadd.f32 %v214, %v370
        %v372 = vpop.f32.mrf.mxu0
        %373 = vmatprep.mubr.bf16.mxu0 0
        %374 = vmatmul.mubr.bf16.gmra.mxu0 %v265
        %v375 = vpop.f32.mrf.mxu0
        %v376 = vadd.f32 %v214, %v375
        %v377 = vpop.f32.mrf.mxu0
        %v378 = vpop.f32.mrf.mxu0
        %v379 = vadd.f32 %v214, %v378
        %v380 = vpop.f32.mrf.mxu0
        %381 = vmatprep.mubr.bf16.mxu0 0
        %382 = vmatmul.mubr.bf16.gmra.mxu0 %v268
        %v383 = vpop.f32.mrf.mxu0
        %v384 = vadd.f32 %v214, %v383
        %v385 = vpop.f32.mrf.mxu0
        %v386 = vpop.f32.mrf.mxu0
        %v387 = vadd.f32 %v214, %v386
        %v388 = vpop.f32.mrf.mxu0
        %389 = vmatprep.mubr.bf16.mxu0 0
        %390 = vmatmul.mubr.bf16.gmra.mxu0 %v271
        %v391 = vpop.f32.mrf.mxu0
        %v392 = vadd.f32 %v214, %v391
        %v393 = vpop.f32.mrf.mxu0
        %v394 = vpop.f32.mrf.mxu0
        %v395 = vadd.f32 %v214, %v394
        %v396 = vpop.f32.mrf.mxu0
        %397 = vmatprep.mubr.bf16.mxu0 0
        %398 = vmatmul.mubr.bf16.gmra.mxu0 %v274
        %v399 = vpop.f32.mrf.mxu0
        %v400 = vadd.f32 %v214, %v399
        %v401 = vpop.f32.mrf.mxu0
        %v402 = vpop.f32.mrf.mxu0
        %v403 = vadd.f32 %v214, %v402
        %v404 = vpop.f32.mrf.mxu0
        %405 = vmatprep.mubr.bf16.mxu0 0
        %406 = vmatmul.mubr.bf16.gmra.mxu0 %v277
        %v407 = vpop.f32.mrf.mxu0
        %v408 = vadd.f32 %v214, %v407
        %v409 = vpop.f32.mrf.mxu0
        %v410 = vpop.f32.mrf.mxu0
        %v411 = vadd.f32 %v214, %v410
        %v412 = vpop.f32.mrf.mxu0
        %413 = vmatprep.mubr.bf16.mxu0 0
        %414 = vmatmul.mubr.bf16.gmra.mxu0 %v280
        %v415 = vpop.f32.mrf.mxu0
        %v416 = vadd.f32 %v214, %v415
        %v417 = vpop.f32.mrf.mxu0
        %v418 = vpop.f32.mrf.mxu0
        %v419 = vadd.f32 %v214, %v418
        %v420 = vpop.f32.mrf.mxu0
        %421 = vmatprep.mubr.bf16.mxu0 0
        %422 = vmatmul.mubr.bf16.gmra.mxu0 %v283
        %v423 = vpop.f32.mrf.mxu0
        %v424 = vadd.f32 %v214, %v423
        %v425 = vpop.f32.mrf.mxu0
        %v426 = vpop.f32.mrf.mxu0
        %v427 = vadd.f32 %v214, %v426
        %v428 = vpop.f32.mrf.mxu0
        %429 = vmatprep.mubr.bf16.mxu0 0
        %430 = vmatmul.mubr.bf16.gmra.mxu0 %v286
        %v431 = vpop.f32.mrf.mxu0
        %v432 = vadd.f32 %v214, %v431
        %v433 = vpop.f32.mrf.mxu0
        %v434 = vpop.f32.mrf.mxu0
        %v435 = vadd.f32 %v214, %v434
        %v436 = vpop.f32.mrf.mxu0
        %437 = vmatprep.mubr.bf16.mxu0 0
        %438 = vmatmul.mubr.bf16.gmra.mxu0 %v289
        %v439 = vpop.f32.mrf.mxu0
        %v440 = vadd.f32 %v214, %v439
        %v441 = vpop.f32.mrf.mxu0
        %v442 = vpop.f32.mrf.mxu0
        %v443 = vadd.f32 %v214, %v442
        %v444 = vpop.f32.mrf.mxu0
        %445 = vmatprep.mubr.bf16.mxu0 0
        %446 = vmatmul.mubr.bf16.gmra.mxu0 %v292
        %v447 = vpop.f32.mrf.mxu0
        %v448 = vadd.f32 %v214, %v447
        %v449 = vpop.f32.mrf.mxu0
        %v450 = vpop.f32.mrf.mxu0
        %v451 = vadd.f32 %v214, %v450
        %v452 = vpop.f32.mrf.mxu0
        %453 = vmatprep.mubr.bf16.mxu0 0
        %454 = vmatmul.mubr.bf16.gmra.mxu0 %v295
        %v455 = vpop.f32.mrf.mxu0
        %v456 = vadd.f32 %v214, %v455
        %v457 = vpop.f32.mrf.mxu0
        %v458 = vpop.f32.mrf.mxu0
        %v459 = vadd.f32 %v214, %v458
        %v460 = vpop.f32.mrf.mxu0
        %461 = vdwg.mxu0
        %v462 = vpack.c.bf16 %v339, %v336
        %v463 = vpack.c.bf16 %v347, %v344
        %v464 = vpack.c.bf16 %v355, %v352
        %v465 = vpack.c.bf16 %v363, %v360
        %v466 = vpack.c.bf16 %v371, %v368
        %v467 = vpack.c.bf16 %v379, %v376
        %v468 = vpack.c.bf16 %v387, %v384
        %v469 = vpack.c.bf16 %v395, %v392
        %v470 = vpack.c.bf16 %v403, %v400
        %v471 = vpack.c.bf16 %v411, %v408
        %v472 = vpack.c.bf16 %v419, %v416
        %v473 = vpack.c.bf16 %v427, %v424
        %v474 = vpack.c.bf16 %v435, %v432
        %v475 = vpack.c.bf16 %v443, %v440
        %v476 = vpack.c.bf16 %v451, %v448
        %v477 = vpack.c.bf16 %v459, %v456
        %v494 = vunpack.c.l.b16 %v462
        %v495 = vunpack.c.h.b16 %v462
        %v496 = vunpack.c.l.b16 %v463
        %v497 = vunpack.c.h.b16 %v463
        %v498 = vunpack.c.l.b16 %v464
        %v499 = vunpack.c.h.b16 %v464
        %v500 = vunpack.c.l.b16 %v465
        %v501 = vunpack.c.h.b16 %v465
        %v502 = vunpack.c.l.b16 %v466
        %v503 = vunpack.c.h.b16 %v466
        %v504 = vunpack.c.l.b16 %v467
        %v505 = vunpack.c.h.b16 %v467
        %v506 = vunpack.c.l.b16 %v468
        %v507 = vunpack.c.h.b16 %v468
        %v508 = vunpack.c.l.b16 %v469
        %v509 = vunpack.c.h.b16 %v469
        %v510 = vunpack.c.l.b16 %v470
        %v511 = vunpack.c.h.b16 %v470
        %v512 = vunpack.c.l.b16 %v471
        %v513 = vunpack.c.h.b16 %v471
        %v514 = vunpack.c.l.b16 %v472
        %v515 = vunpack.c.h.b16 %v472
        %v516 = vunpack.c.l.b16 %v473
        %v517 = vunpack.c.h.b16 %v473
        %v518 = vunpack.c.l.b16 %v474
        %v519 = vunpack.c.h.b16 %v474
        %v520 = vunpack.c.l.b16 %v475
        %v521 = vunpack.c.h.b16 %v475
        %v522 = vunpack.c.l.b16 %v476
        %v523 = vunpack.c.h.b16 %v476
        %v524 = vunpack.c.l.b16 %v477
        %v525 = vunpack.c.h.b16 %v477
        %v526 = vpack.c.b16 %v494, %v494
        %v527 = vpack.c.b16 %v495, %v495
        %v528 = vpack.c.b16 %v496, %v496
        %v529 = vpack.c.b16 %v497, %v497
        %v530 = vpack.c.b16 %v498, %v498
        %v531 = vpack.c.b16 %v499, %v499
        %v532 = vpack.c.b16 %v500, %v500
        %v533 = vpack.c.b16 %v501, %v501
        %v534 = vpack.c.b16 %v502, %v502
        %v535 = vpack.c.b16 %v503, %v503
        %v536 = vpack.c.b16 %v504, %v504
        %v537 = vpack.c.b16 %v505, %v505
        %v538 = vpack.c.b16 %v506, %v506
        %v539 = vpack.c.b16 %v507, %v507
        %v540 = vpack.c.b16 %v508, %v508
        %v541 = vpack.c.b16 %v509, %v509
        %v542 = vpack.c.b16 %v510, %v510
        %v543 = vpack.c.b16 %v511, %v511
        %v544 = vpack.c.b16 %v512, %v512
        %v545 = vpack.c.b16 %v513, %v513
        %v546 = vpack.c.b16 %v514, %v514
        %v547 = vpack.c.b16 %v515, %v515
        %v548 = vpack.c.b16 %v516, %v516
        %v549 = vpack.c.b16 %v517, %v517
        %v550 = vpack.c.b16 %v518, %v518
        %v551 = vpack.c.b16 %v519, %v519
        %v552 = vpack.c.b16 %v520, %v520
        %v553 = vpack.c.b16 %v521, %v521
        %v554 = vpack.c.b16 %v522, %v522
        %v555 = vpack.c.b16 %v523, %v523
        %v556 = vpack.c.b16 %v524, %v524
        %v557 = vpack.c.b16 %v525, %v525
        %590 = vst [vmem:[%s199] sm:$0xf] %v526
        %591 = vst [vmem:[%s199 + $0x4] sm:$0xf] %v527
        %592 = vst [vmem:[%s199 + $0x8] sm:$0xf] %v528
        %593 = vst [vmem:[%s199 + $0xc] sm:$0xf] %v529
        %594 = vst [vmem:[%s199 + $0x10] sm:$0xf] %v530
        %595 = vst [vmem:[%s199 + $0x14] sm:$0xf] %v531
        %596 = vst [vmem:[%s199 + $0x18] sm:$0xf] %v532
        %597 = vst [vmem:[%s199 + $0x1c] sm:$0xf] %v533
        %598 = vst [vmem:[%s199 + $0x20] sm:$0xf] %v534
        %599 = vst [vmem:[%s199 + $0x24] sm:$0xf] %v535
        %600 = vst [vmem:[%s199 + $0x28] sm:$0xf] %v536
        %601 = vst [vmem:[%s199 + $0x2c] sm:$0xf] %v537
        %602 = vst [vmem:[%s199 + $0x30] sm:$0xf] %v538
        %603 = vst [vmem:[%s199 + $0x34] sm:$0xf] %v539
        %604 = vst [vmem:[%s199 + $0x38] sm:$0xf] %v540
        %605 = vst [vmem:[%s199 + $0x3c] sm:$0xf] %v541
        %606 = vst [vmem:[%s199 + $0x40] sm:$0xf] %v542
        %607 = vst [vmem:[%s199 + $0x44] sm:$0xf] %v543
        %608 = vst [vmem:[%s199 + $0x48] sm:$0xf] %v544
        %609 = vst [vmem:[%s199 + $0x4c] sm:$0xf] %v545
        %610 = vst [vmem:[%s199 + $0x50] sm:$0xf] %v546
        %611 = vst [vmem:[%s199 + $0x54] sm:$0xf] %v547
        %612 = vst [vmem:[%s199 + $0x58] sm:$0xf] %v548
        %613 = vst [vmem:[%s199 + $0x5c] sm:$0xf] %v549
        %614 = vst [vmem:[%s199 + $0x60] sm:$0xf] %v550
        %615 = vst [vmem:[%s199 + $0x64] sm:$0xf] %v551
        %616 = vst [vmem:[%s199 + $0x68] sm:$0xf] %v552
        %617 = vst [vmem:[%s199 + $0x6c] sm:$0xf] %v553
        %618 = vst [vmem:[%s199 + $0x70] sm:$0xf] %v554
        %619 = vst [vmem:[%s199 + $0x74] sm:$0xf] %v555
        %620 = vst [vmem:[%s199 + $0x78] sm:$0xf] %v556
        %621 = vst [vmem:[%s199 + $0x7c] sm:$0xf] %v557
        %s622 = sand.u32 %s97, 1
        %s623 = scalar_lea.sflag [#allocation4], %s622
        %s624 = sand.u32 %s97, 1
        %s625 = smul.addr %s624, 128
        %s626 = scalar_lea.vmem [#allocation7], %s625
        // Predicated region
        $region41: #{tpu_custom_call.1} parent=31 // pred_check
          %p627 = pneg %p107
        $region42: #{tpu_custom_call.1} parent=31 // pred_check_branch
          %629 = sbr.rel (%p627) target = $region44
        $region43: #{tpu_custom_call.1} parent=31 // pred_region
          %s630 = smul.u32 32, %s21
          %s632 = ssub.s32 2048, 2048
          %633 = vsyncadd %s623, %s632
          %s634 = smul.addr %s630, 64
          %s635 = scalar_lea.hbm %s3, %s634
          %s636 = sshll.u32 %s626, 4
          %s637 = int_to_ptr.vmem [resolvable:$true] %s636
          %642 = dma.vmem_to_hbm [thread:$0]  %s637, 2048, %s635, %s623, 64, 64, 4
        $region44: #{tpu_custom_call.1} parent=31 // pred_fallthru
          _
      $region32: #{tpu_custom_call.1} parent=5 // pred_fallthru
        _
      %p643 = scmp.le.s32.totalorder 2, %s16
      // Predicated region
      $region45: #{tpu_custom_call.1} parent=5 // pred_check
        %p644 = pneg %p643
      $region46: #{tpu_custom_call.1} parent=5 // pred_check_branch
        %646 = sbr.rel (%p644) target = $region48
      $region47: #{tpu_custom_call.1} parent=5 // pred_region
        %s647 = ssub.s32 %s16, 2
        // Predicated region
        $region49: #{tpu_custom_call.1} parent=47 // pred_check
          %p648 = pneg %p113
        $region50: #{tpu_custom_call.1} parent=47 // pred_check_branch
          %650 = sbr.rel (%p648) target = $region52
        $region51: #{tpu_custom_call.1} parent=47 // pred_region
          %s651 = sand.u32 %s98, 1
          %s652 = scalar_lea.sflag [#allocation4], %s651
          %s653 = sand.u32 %s98, 1
          %s654 = smul.addr %s653, 128
          %s655 = scalar_lea.vmem [#allocation7], %s654
          %656 = dma.done %s652, 2048
        $region52: #{tpu_custom_call.1} parent=47 // pred_fallthru
          _
      $region48: #{tpu_custom_call.1} parent=5 // pred_fallthru
        _
    $region6: #{tpu_custom_call.1} parent=1 // loop_footer
      %s20 = sadd.s32 1, %s16
    $region7: #{tpu_custom_call.1} parent=1 // loop_footer_branch
      %15 = sbr.rel target = $region3
    $region8: #{tpu_custom_call.1} parent=1 // loop_exit
      _
    %657 = vsyncpa [#allocation3], 1
    %s658 = scalar_lea.sflag [#allocation3], 1
    %659 = vsyncpa %s658, 1
    %660 = vsyncpa [#allocation6], 1
    %661 = vsyncpa [#allocation4], 1
    %s662 = scalar_lea.sflag [#allocation4], 1
    %663 = vsyncpa %s662, 1

</llo_original>
